<compile_context>
chip_gen: v7x
topology: tpu7x:2x2x1
jax: 0.10.0
libtpu: 0.0.40
codegen_flags: <defaults>
</compile_context>

<pallas_src>
import functools

import jax
import jax.numpy as jnp
from jax.experimental import pallas as pl
from jax.experimental.pallas import tpu as pltpu


def _round_up(x, m):
    return (x + m - 1) // m * m


def critic_kernel(s_ref, a_ref, w1_ref, b1_ref, w2_ref, b2_ref,
                  w3_ref, b3_ref, o_ref, x_scratch):
    """One batch tile of the critic MLP.

    s: [tm, S]           a: [tm, A]
    w1: [S+A, H]  b1: [1, H]   (biases are f32; weights in compute dtype)
    w2: [H, H]    b2: [1, H]
    w3: [H, A]    b3: [1, A]
    o:  [tm, A]  (f32)
    x_scratch: [tm, S+A] VMEM staging buffer (compute dtype)
    """
    S = s_ref.shape[1]
    A = a_ref.shape[1]

    # Stage state|action side by side -> a single layer-1 MXU pass instead of
    # two tiny-K matmuls (fused concat, preserves cat([s, a], 1) ordering).
    x_scratch[:, :S] = s_ref[...]
    x_scratch[:, S:S + A] = a_ref[...]

    h1 = jnp.dot(x_scratch[...], w1_ref[...],
                 preferred_element_type=jnp.float32) + b1_ref[...]
    h1 = jnp.maximum(h1, 0.0)  # ReLU (f32 elementwise)

    h2 = jnp.dot(h1.astype(w2_ref.dtype), w2_ref[...],
                 preferred_element_type=jnp.float32) + b2_ref[...]
    h2 = jnp.maximum(h2, 0.0)  # ReLU (f32 elementwise)

    q = jnp.dot(h2.astype(w3_ref.dtype), w3_ref[...],
                preferred_element_type=jnp.float32) + b3_ref[...]
    o_ref[...] = q.astype(o_ref.dtype)


def init_critic_params(key, state_dim, action_dim, hidden_dim):
    """Deterministic init mimicking PyTorch's default Linear init
    (uniform(-1/sqrt(fan_in), 1/sqrt(fan_in))). Layout: W is [in, out]."""
    def linear(key, fan_in, fan_out):
        kw, kb = jax.random.split(key)
        bound = 1.0 / jnp.sqrt(float(fan_in))
        w = jax.random.uniform(kw, (fan_in, fan_out), jnp.float32, -bound, bound)
        b = jax.random.uniform(kb, (1, fan_out), jnp.float32, -bound, bound)
        return w, b

    k1, k2, k3 = jax.random.split(key, 3)
    w1, b1 = linear(k1, state_dim + action_dim, hidden_dim)
    w2, b2 = linear(k2, hidden_dim, hidden_dim)
    w3, b3 = linear(k3, hidden_dim, action_dim)
    return (w1, b1, w2, b2, w3, b3)


def prepare_critic_params(params, compute_dtype=jnp.float32):
    """One-time param prep: cast matmul operands to the compute dtype
    (use bf16 on v6e/v7x); biases stay f32 (f32 accumulation + f32 elementwise
    in-kernel).  w1 stays packed [S+A, H] -- the kernel fuses the concat."""
    w1, b1, w2, b2, w3, b3 = params
    cd = compute_dtype
    return {
        "w1": w1.astype(cd),
        "b1": b1.astype(jnp.float32),
        "w2": w2.astype(cd),
        "b2": b2.astype(jnp.float32),
        "w3": w3.astype(cd),
        "b3": b3.astype(jnp.float32),
    }


def critic_forward(state, action, prepped, *, block_m=1024):
    """Pallas-backed forward of the TD3 Critic.

    state:  [B, S]    action: [B, A]
    prepped: output of prepare_critic_params(...)
    returns: [B, action_dim] float32
    """
    cd = prepped["w1"].dtype
    s = state.astype(cd)
    a = action.astype(cd)

    B, S = s.shape
    A_in = a.shape[1]
    K, H = prepped["w1"].shape
    A_out = prepped["w3"].shape[1]
    assert K == S + A_in, "packed w1 must have S+A input rows"

    # Batch tiling: aim for >= 2 balanced grid steps (v7x megacore + DMA/compute
    # overlap), blocks rounded to the sublane packing of the compute dtype.
    sublane = 16 if cd == jnp.bfloat16 else 8
    n_blocks = max(2, pl.cdiv(B, block_m))
    tm = _round_up(pl.cdiv(B, n_blocks), sublane)
    tm = min(tm, _round_up(B, sublane))
    grid = (pl.cdiv(B, tm),)

    const = lambda i: (0, 0)     # weights/biases resident across the batch grid
    batched = lambda i: (i, 0)   # activations / output tiled over batch

    flops = 2 * B * (K * H + H * H + H * A_out)
    bytes_accessed = (
        s.nbytes + a.nbytes
        + prepped["w1"].nbytes + prepped["b1"].nbytes
        + prepped["w2"].nbytes + prepped["b2"].nbytes
        + prepped["w3"].nbytes + prepped["b3"].nbytes
        + B * A_out * 4
    )

    # NOTE: for H >= 1024 f32 on v7x (64 MiB VMEM, 32 MiB scoped default),
    # switch to compute_dtype=bf16 and/or pass vmem_limit_bytes here.
    return pl.pallas_call(
        critic_kernel,
        out_shape=jax.ShapeDtypeStruct((B, A_out), jnp.float32),
        grid_spec=pltpu.PrefetchScalarGridSpec(
            num_scalar_prefetch=0,
            grid=grid,
            in_specs=[
                pl.BlockSpec((tm, S), batched),      # state
                pl.BlockSpec((tm, A_in), batched),   # action
                pl.BlockSpec((K, H), const),         # w1 (packed [S+A, H])
                pl.BlockSpec((1, H), const),         # b1
                pl.BlockSpec((H, H), const),         # w2
                pl.BlockSpec((1, H), const),         # b2
                pl.BlockSpec((H, A_out), const),     # w3
                pl.BlockSpec((1, A_out), const),     # b3
            ],
            out_specs=pl.BlockSpec((tm, A_out), batched),
            scratch_shapes=[pltpu.VMEM((tm, K), cd)],
        ),
        compiler_params=pltpu.CompilerParams(
            dimension_semantics=("parallel",),
        ),
        cost_estimate=pl.CostEstimate(
            flops=flops, transcendentals=0, bytes_accessed=bytes_accessed),
    )(s, a,
      prepped["w1"], prepped["b1"],
      prepped["w2"], prepped["b2"],
      prepped["w3"], prepped["b3"])


def critic_reference(state, action, params):
    """Pure-JAX reference (mirrors the PyTorch module exactly)."""
    w1, b1, w2, b2, w3, b3 = params
    dot = functools.partial(jnp.dot, precision=jax.lax.Precision.HIGHEST)
    x = jnp.concatenate([state, action], axis=1)
    h1 = jnp.maximum(dot(x, w1) + b1, 0.0)
    h2 = jnp.maximum(dot(h1, w2) + b2, 0.0)
    return dot(h2, w3) + b3


if __name__ == "__main__":
    # Small shapes consistent with the module: state_dim=16, action_dim=4,
    # hidden_dim=32.
    S, A, H = 16, 4, 32

    key = jax.random.PRNGKey(0)
    k_state, k_action, k_params, k_state2, k_action2 = jax.random.split(key, 5)
    params = init_critic_params(k_params, S, A, H)

    # f32 compute for a tight check; pass compute_dtype=jnp.bfloat16 on
    # v6e/v7x for MXU/DMA savings (accumulation stays f32 in-kernel).
    prepped = prepare_critic_params(params, compute_dtype=jnp.float32)

    # Tolerance covers the MXU's internal f32 pass decomposition; structural
    # bugs (wrong concat order / bias / ReLU) would show up as O(1) errors.
    TOL = 2e-2

    # Case 1: batch divisible by the sublane tile.
    B1 = 8
    state = jax.random.normal(k_state, (B1, S), jnp.float32)
    action = jax.random.normal(k_action, (B1, A), jnp.float32)
    q = jax.block_until_ready(critic_forward(state, action, prepped))
    q_ref = critic_reference(state, action, params)
    assert q.shape == (B1, A)
    assert jnp.allclose(q, q_ref, atol=TOL, rtol=TOL)

    # Case 2: batch not divisible by the block size (exercises the padded
    # tail block and a multi-step grid).
    B2 = 20
    state2 = jax.random.normal(k_state2, (B2, S), jnp.float32)
    action2 = jax.random.normal(k_action2, (B2, A), jnp.float32)
    q2 = jax.block_until_ready(critic_forward(state2, action2, prepped))
    q2_ref = critic_reference(state2, action2, params)
    assert q2.shape == (B2, A)
    assert jnp.allclose(q2, q2_ref, atol=TOL, rtol=TOL)

    print("KERNEL_OK")
</pallas_src>

<mosaic_0001>
module attributes {stable_mosaic.version = 11 : i64} {
  func.func @critic_kernel(%arg0: i32, %arg1: memref<8x16xf32, #tpu.memory_space<vmem>>, %arg2: memref<8x4xf32, #tpu.memory_space<vmem>>, %arg3: memref<20x32xf32, #tpu.memory_space<vmem>>, %arg4: memref<1x32xf32, #tpu.memory_space<vmem>>, %arg5: memref<32x32xf32, #tpu.memory_space<vmem>>, %arg6: memref<1x32xf32, #tpu.memory_space<vmem>>, %arg7: memref<32x4xf32, #tpu.memory_space<vmem>>, %arg8: memref<1x4xf32, #tpu.memory_space<vmem>>, %arg9: memref<8x4xf32, #tpu.memory_space<vmem>>, %arg10: memref<8x20xf32, #tpu.memory_space<vmem>>) attributes {dimension_semantics = [#tpu.dimension_semantics<parallel>], iteration_bounds = array<i64: 1>, scalar_prefetch = 0 : i64, scratch_operands = 1 : i64, tpu.core_type = #tpu.core_type<tc>, window_params = [{transform_indices = @transform_0, window_bounds = array<i64: 8, 16>}, {transform_indices = @transform_1, window_bounds = array<i64: 8, 4>}, {pipeline_mode = #tpu.pipeline_mode<synchronous>, transform_indices = @transform_2, window_bounds = array<i64: 20, 32>}, {pipeline_mode = #tpu.pipeline_mode<synchronous>, transform_indices = @transform_3, window_bounds = array<i64: 1, 32>}, {pipeline_mode = #tpu.pipeline_mode<synchronous>, transform_indices = @transform_4, window_bounds = array<i64: 32, 32>}, {pipeline_mode = #tpu.pipeline_mode<synchronous>, transform_indices = @transform_5, window_bounds = array<i64: 1, 32>}, {pipeline_mode = #tpu.pipeline_mode<synchronous>, transform_indices = @transform_6, window_bounds = array<i64: 32, 4>}, {pipeline_mode = #tpu.pipeline_mode<synchronous>, transform_indices = @transform_7, window_bounds = array<i64: 1, 4>}, {transform_indices = @transform_8, window_bounds = array<i64: 8, 4>}]} {
    %c0 = arith.constant 0 : index
    %c0_0 = arith.constant 0 : index
    %0 = vector.load %arg1[%c0, %c0_0] : memref<8x16xf32, #tpu.memory_space<vmem>>, vector<8x16xf32>
    %c0_1 = arith.constant 0 : index
    %c0_2 = arith.constant 0 : index
    %1 = vector.load %arg10[%c0_1, %c0_2] : memref<8x20xf32, #tpu.memory_space<vmem>>, vector<8x16xf32>
    tpu.vector_store %arg10[%c0_1, %c0_2], %0 {strides = array<i32>} : memref<8x20xf32, #tpu.memory_space<vmem>>, vector<8x16xf32>,
    %c0_3 = arith.constant 0 : index
    %c0_4 = arith.constant 0 : index
    %2 = vector.load %arg2[%c0_3, %c0_4] : memref<8x4xf32, #tpu.memory_space<vmem>>, vector<8x4xf32>
    %c0_5 = arith.constant 0 : index
    %c16 = arith.constant 16 : index
    %3 = vector.load %arg10[%c0_5, %c16] : memref<8x20xf32, #tpu.memory_space<vmem>>, vector<8x4xf32>
    tpu.vector_store %arg10[%c0_5, %c16], %2 {strides = array<i32>} : memref<8x20xf32, #tpu.memory_space<vmem>>, vector<8x4xf32>,
    %c0_6 = arith.constant 0 : index
    %c0_7 = arith.constant 0 : index
    %4 = vector.load %arg10[%c0_6, %c0_7] : memref<8x20xf32, #tpu.memory_space<vmem>>, vector<8x20xf32>
    %c0_8 = arith.constant 0 : index
    %c0_9 = arith.constant 0 : index
    %5 = vector.load %arg3[%c0_8, %c0_9] : memref<20x32xf32, #tpu.memory_space<vmem>>, vector<20x32xf32>
    %cst = arith.constant dense<0.000000e+00> : vector<8x32xf32>
    %6 = tpu.matmul %4, %5, %cst {dimension_numbers = #tpu.dot_dimension_numbers<[1], [0], [0], [1], [0, 0, 1, 1], [], []>} : vector<8x20xf32>, vector<20x32xf32>, vector<8x32xf32> -> vector<8x32xf32>
    %c0_10 = arith.constant 0 : index
    %c0_11 = arith.constant 0 : index
    %7 = vector.load %arg4[%c0_10, %c0_11] : memref<1x32xf32, #tpu.memory_space<vmem>>, vector<1x32xf32>
    %8 = vector.broadcast %7 : vector<1x32xf32> to vector<8x32xf32>
    %9 = arith.addf %6, %8 : vector<8x32xf32>
    %cst_12 = arith.constant 0.000000e+00 : f32
    %10 = vector.broadcast %cst_12 : f32 to vector<8x32xf32>
    %11 = arith.maximumf %9, %10 : vector<8x32xf32>
    %c0_13 = arith.constant 0 : index
    %c0_14 = arith.constant 0 : index
    %12 = vector.load %arg5[%c0_13, %c0_14] : memref<32x32xf32, #tpu.memory_space<vmem>>, vector<32x32xf32>
    %cst_15 = arith.constant dense<0.000000e+00> : vector<8x32xf32>
    %13 = tpu.matmul %11, %12, %cst_15 {dimension_numbers = #tpu.dot_dimension_numbers<[1], [0], [0], [1], [0, 0, 1, 1], [], []>} : vector<8x32xf32>, vector<32x32xf32>, vector<8x32xf32> -> vector<8x32xf32>
    %c0_16 = arith.constant 0 : index
    %c0_17 = arith.constant 0 : index
    %14 = vector.load %arg6[%c0_16, %c0_17] : memref<1x32xf32, #tpu.memory_space<vmem>>, vector<1x32xf32>
    %15 = vector.broadcast %14 : vector<1x32xf32> to vector<8x32xf32>
    %16 = arith.addf %13, %15 : vector<8x32xf32>
    %cst_18 = arith.constant 0.000000e+00 : f32
    %17 = vector.broadcast %cst_18 : f32 to vector<8x32xf32>
    %18 = arith.maximumf %16, %17 : vector<8x32xf32>
    %c0_19 = arith.constant 0 : index
    %c0_20 = arith.constant 0 : index
    %19 = vector.load %arg7[%c0_19, %c0_20] : memref<32x4xf32, #tpu.memory_space<vmem>>, vector<32x4xf32>
    %cst_21 = arith.constant dense<0.000000e+00> : vector<8x4xf32>
    %20 = tpu.matmul %18, %19, %cst_21 {dimension_numbers = #tpu.dot_dimension_numbers<[1], [0], [0], [1], [0, 0, 1, 1], [], []>} : vector<8x32xf32>, vector<32x4xf32>, vector<8x4xf32> -> vector<8x4xf32>
    %c0_22 = arith.constant 0 : index
    %c0_23 = arith.constant 0 : index
    %21 = vector.load %arg8[%c0_22, %c0_23] : memref<1x4xf32, #tpu.memory_space<vmem>>, vector<1x4xf32>
    %22 = vector.broadcast %21 : vector<1x4xf32> to vector<8x4xf32>
    %23 = arith.addf %20, %22 : vector<8x4xf32>
    %c0_24 = arith.constant 0 : index
    %c0_25 = arith.constant 0 : index
    %24 = vector.load %arg9[%c0_24, %c0_25] : memref<8x4xf32, #tpu.memory_space<vmem>>, vector<8x4xf32>
    tpu.vector_store %arg9[%c0_24, %c0_25], %23 {strides = array<i32>} : memref<8x4xf32, #tpu.memory_space<vmem>>, vector<8x4xf32>,
    return
  }
  func.func @transform_0(%arg0: i32) -> (i32, i32) {
    %c0_i32 = arith.constant 0 : i32
    %c0_i32_0 = arith.constant 0 : i32
    return %arg0, %c0_i32 : i32, i32
  }
  func.func @transform_1(%arg0: i32) -> (i32, i32) {
    %c0_i32 = arith.constant 0 : i32
    %c0_i32_0 = arith.constant 0 : i32
    return %arg0, %c0_i32 : i32, i32
  }
  func.func @transform_2(%arg0: i32) -> (i32, i32) {
    %c0_i32 = arith.constant 0 : i32
    %c0_i32_0 = arith.constant 0 : i32
    %c0_i32_1 = arith.constant 0 : i32
    return %c0_i32, %c0_i32_0 : i32, i32
  }
  func.func @transform_3(%arg0: i32) -> (i32, i32) {
    %c0_i32 = arith.constant 0 : i32
    %c0_i32_0 = arith.constant 0 : i32
    %c0_i32_1 = arith.constant 0 : i32
    return %c0_i32, %c0_i32_0 : i32, i32
  }
  func.func @transform_4(%arg0: i32) -> (i32, i32) {
    %c0_i32 = arith.constant 0 : i32
    %c0_i32_0 = arith.constant 0 : i32
    %c0_i32_1 = arith.constant 0 : i32
    return %c0_i32, %c0_i32_0 : i32, i32
  }
  func.func @transform_5(%arg0: i32) -> (i32, i32) {
    %c0_i32 = arith.constant 0 : i32
    %c0_i32_0 = arith.constant 0 : i32
    %c0_i32_1 = arith.constant 0 : i32
    return %c0_i32, %c0_i32_0 : i32, i32
  }
  func.func @transform_6(%arg0: i32) -> (i32, i32) {
    %c0_i32 = arith.constant 0 : i32
    %c0_i32_0 = arith.constant 0 : i32
    %c0_i32_1 = arith.constant 0 : i32
    return %c0_i32, %c0_i32_0 : i32, i32
  }
  func.func @transform_7(%arg0: i32) -> (i32, i32) {
    %c0_i32 = arith.constant 0 : i32
    %c0_i32_0 = arith.constant 0 : i32
    %c0_i32_1 = arith.constant 0 : i32
    return %c0_i32, %c0_i32_0 : i32, i32
  }
  func.func @transform_8(%arg0: i32) -> (i32, i32) {
    %c0_i32 = arith.constant 0 : i32
    %c0_i32_0 = arith.constant 0 : i32
    return %arg0, %c0_i32 : i32, i32
  }
}

</mosaic_0001>

<llo_original>
// kernel: tpu_custom_call.1
$region0: #{tpu_custom_call.1}
  #allocation0 [shape = 'u32[]', space=smem, size = 0x4, offset = 0x4, fixed_abs, tag = 'smem constant byte address 0x4 - core index']
  #allocation1 [shape = 'u32[144,128]{1,0:T(1,128)}', space=vmem, size = 0x12000, scoped, tag = 'internal scratch']
  #allocation2 [shape = 'f32[8,20]{1,0:T(8,128)}', space=vmem, size = 0x1000, scoped, tag = 'scratch operand']
  %s0 = inlined_call_operand.hbm [shape: f32[8,16], index: 0, kind: input, shape index: {}]
  %s1 = inlined_call_operand.vmem [shape: f32[8,4], index: 1, kind: input, shape index: {}]
  %s2 = inlined_call_operand.vmem [shape: f32[20,32], index: 2, kind: input, shape index: {}]
  %s3 = inlined_call_operand.vmem [shape: f32[1,32], index: 3, kind: input, shape index: {}]
  %s4 = inlined_call_operand.vmem [shape: f32[32,32], index: 4, kind: input, shape index: {}]
  %s5 = inlined_call_operand.vmem [shape: f32[1,32], index: 5, kind: input, shape index: {}]
  %s6 = inlined_call_operand.vmem [shape: f32[32,4], index: 6, kind: input, shape index: {}]
  %s7 = inlined_call_operand.vmem [shape: f32[1,4], index: 7, kind: input, shape index: {}]
  %s8 = inlined_call_operand.vmem [shape: f32[8,4], index: 8, kind: output, shape index: {}]
  %s9 = sld [smem:[#allocation0]]
  $region46: #{tpu_custom_call.1} parent=0
    _
  %s11 = ssub.s32 1, %s9
  %s12 = scalar_select 0, %s11, %s9
  $region1: #{tpu_custom_call.1} parent=0
    #allocation3 [shape = 'u8[4096]{0}', space=vmem, size = 0x1000, scoped, tag = 'input window, operand 0, single buffered']
    #allocation4 [shape = 's32[1]{0}', space=sflag, size = 0x4, scoped, tag = 'scoped memory for tpu_custom_call.1']
    %13 = vsyncpa [#allocation4], 0
    // Predicated region
    $region2: #{tpu_custom_call.1} parent=1 // pred_check
      _
    $region3: #{tpu_custom_call.1} parent=1 // pred_check_branch
      %15 = sbr.rel (0) target = $region5
    $region4: #{tpu_custom_call.1} parent=1 // pred_region
      %s17 = ssub.s32 128, 128
      %18 = vsyncadd [#allocation4], %s17
      %s20 = sshll.u32 [#allocation3], 4
      %s21 = int_to_ptr.vmem [resolvable:$true] %s20
      %23 = dma.hbm_to_vmem [thread:$0]  %s0, 128, %s21, [#allocation4]
    $region5: #{tpu_custom_call.1} parent=1 // pred_fallthru
      _
    // Predicated region
    $region6: #{tpu_custom_call.1} parent=1 // pred_check
      _
    $region7: #{tpu_custom_call.1} parent=1 // pred_check_branch
      %25 = sbr.rel (0) target = $region9
    $region8: #{tpu_custom_call.1} parent=1 // pred_region
      _
    $region9: #{tpu_custom_call.1} parent=1 // pred_fallthru
      _
    // Predicated region
    $region10: #{tpu_custom_call.1} parent=1 // pred_check
      _
    $region11: #{tpu_custom_call.1} parent=1 // pred_check_branch
      %27 = sbr.rel (0) target = $region13
    $region12: #{tpu_custom_call.1} parent=1 // pred_region
      _
    $region13: #{tpu_custom_call.1} parent=1 // pred_fallthru
      _
    // Predicated region
    $region14: #{tpu_custom_call.1} parent=1 // pred_check
      _
    $region15: #{tpu_custom_call.1} parent=1 // pred_check_branch
      %29 = sbr.rel (0) target = $region17
    $region16: #{tpu_custom_call.1} parent=1 // pred_region
      _
    $region17: #{tpu_custom_call.1} parent=1 // pred_fallthru
      _
    // Predicated region
    $region18: #{tpu_custom_call.1} parent=1 // pred_check
      _
    $region19: #{tpu_custom_call.1} parent=1 // pred_check_branch
      %31 = sbr.rel (0) target = $region21
    $region20: #{tpu_custom_call.1} parent=1 // pred_region
      _
    $region21: #{tpu_custom_call.1} parent=1 // pred_fallthru
      _
    // Predicated region
    $region22: #{tpu_custom_call.1} parent=1 // pred_check
      _
    $region23: #{tpu_custom_call.1} parent=1 // pred_check_branch
      %33 = sbr.rel (0) target = $region25
    $region24: #{tpu_custom_call.1} parent=1 // pred_region
      _
    $region25: #{tpu_custom_call.1} parent=1 // pred_fallthru
      _
    // Predicated region
    $region26: #{tpu_custom_call.1} parent=1 // pred_check
      _
    $region27: #{tpu_custom_call.1} parent=1 // pred_check_branch
      %35 = sbr.rel (0) target = $region29
    $region28: #{tpu_custom_call.1} parent=1 // pred_region
      _
    $region29: #{tpu_custom_call.1} parent=1 // pred_fallthru
      _
    // Predicated region
    $region30: #{tpu_custom_call.1} parent=1 // pred_check
      _
    $region31: #{tpu_custom_call.1} parent=1 // pred_check_branch
      %37 = sbr.rel (0) target = $region33
    $region32: #{tpu_custom_call.1} parent=1 // pred_region
      _
    $region33: #{tpu_custom_call.1} parent=1 // pred_fallthru
      _
    // Predicated region
    $region34: #{tpu_custom_call.1} parent=1 // pred_check
      _
    $region35: #{tpu_custom_call.1} parent=1 // pred_check_branch
      %39 = sbr.rel (0) target = $region37
    $region36: #{tpu_custom_call.1} parent=1 // pred_region
      %40 = dma.done [#allocation4], 128
    $region37: #{tpu_custom_call.1} parent=1 // pred_fallthru
      _
    %v41 = vld [vmem:[#allocation3] sm:$0xff]
    %vm42 = vcmask 130048
    %43 = vst.msk [vmem:[#allocation2] sm:$0xff] %vm42, %v41
    %v44 = vld [vmem:[%s1] sm:$0xff]
    %46 = vrot.lane.b32.xlu0 %v44, 16
    %v47 = vpop.permute.xlu0 %46
    %vm49 = vcmask 162944
    %50 = vst.msk [vmem:[#allocation2] sm:$0xff] %vm49, %v47
    %v51 = vld [vmem:[#allocation2] sm:$0xff]
    %v52 = vld [vmem:[%s2] sm:$0xff]
    %v53 = vld [vmem:[%s2 + $0x8] sm:$0xff]
    %v54 = vld [vmem:[%s2 + $0x10] sm:$0xf]
    %v55 = vld [vmem:[%s3] sm:$0x1]
    %v57 = vlaneseq
    %v58 = vshrl.u32 %v57, 7
    %v59 = vsub.s32 0, %v58
    %v60 = vrot.slane %v55, %v59
    %vm62 = vcmask 162816
    %v64 = vsel %vm62, %v51, 0
    %vm66 = vcmask 1043456
    %v68 = vsel %vm66, %v54, 0
    %70 = vmatprep.subr.mxu0 0.0
    %71 = vmatpush1.msra.mxu0 %v52
    %72 = vmatprep.subr.mxu0 0.0
    %73 = vmatpush1.msra.mxu0 %v53
    %74 = vmatprep.subr.mxu0 0.0
    %75 = vmatpush1.msra.mxu0 %v68
    %76 = vmatprep.subr.mxu0 0.0
    %77 = vmatpush1.msra.mxu0 0.0
    %78 = vmatprep.subr.mxu0 0.0
    %79 = vmatpush1.msra.mxu0 0.0
    %80 = vmatprep.subr.mxu0 0.0
    %81 = vmatpush1.msra.mxu0 0.0
    %82 = vmatprep.subr.mxu0 0.0
    %83 = vmatpush1.msra.mxu0 0.0
    %84 = vmatprep.subr.mxu0 0.0
    %85 = vmatpush1.msra.mxu0 0.0
    %86 = vmatprep.subr.mxu0 0.0
    %87 = vmatpush1.msra.mxu0 0.0
    %88 = vmatprep.subr.mxu0 0.0
    %89 = vmatpush1.msra.mxu0 0.0
    %90 = vmatprep.subr.mxu0 0.0
    %91 = vmatpush1.msra.mxu0 0.0
    %92 = vmatprep.subr.mxu0 0.0
    %93 = vmatpush1.msra.mxu0 0.0
    %94 = vmatprep.subr.mxu0 0.0
    %95 = vmatpush1.msra.mxu0 0.0
    %96 = vmatprep.subr.mxu0 0.0
    %97 = vmatpush1.msra.mxu0 0.0
    %98 = vmatprep.subr.mxu0 0.0
    %99 = vmatpush1.msra.mxu0 0.0
    %100 = vmatprep.subr.mxu0 0.0
    %101 = vmatpush1.msra.mxu0 0.0
    %102 = vmatprep.subr.mxu0 0.0
    %103 = vmatpush1.msra.mxu0 0.0
    %104 = vmatprep.subr.mxu0 0.0
    %105 = vmatpush1.msra.mxu0 0.0
    %106 = vmatprep.subr.mxu0 0.0
    %107 = vmatpush1.msra.mxu0 0.0
    %108 = vmatprep.subr.mxu0 0.0
    %109 = vmatpush1.msra.mxu0 0.0
    %110 = vmatprep.subr.mxu0 0.0
    %111 = vmatpush1.msra.mxu0 0.0
    %112 = vmatprep.subr.mxu0 0.0
    %113 = vmatpush1.msra.mxu0 0.0
    %114 = vmatprep.subr.mxu0 0.0
    %115 = vmatpush1.msra.mxu0 0.0
    %116 = vmatprep.subr.mxu0 0.0
    %117 = vmatpush1.msra.mxu0 0.0
    %118 = vmatprep.subr.mxu0 0.0
    %119 = vmatpush1.msra.mxu0 0.0
    %120 = vmatprep.subr.mxu0 0.0
    %121 = vmatpush1.msra.mxu0 0.0
    %122 = vmatprep.subr.mxu0 0.0
    %123 = vmatpush1.msra.mxu0 0.0
    %124 = vmatprep.subr.mxu0 0.0
    %125 = vmatpush1.msra.mxu0 0.0
    %126 = vmatprep.subr.mxu0 0.0
    %127 = vmatpush1.msra.mxu0 0.0
    %128 = vmatprep.subr.mxu0 0.0
    %129 = vmatpush1.msra.mxu0 0.0
    %130 = vmatprep.subr.mxu0 0.0
    %131 = vmatpush1.msra.mxu0 0.0
    %132 = vmatprep.subr.mxu0 0.0
    %133 = vmatpush1.msra.mxu0 0.0
    %134 = vmatprep.mubr.f32.mxu0 0.0
    %135 = vmatmul.mubr.f32.gmra.mrb[0].mxu0 %v64
    %v136 = vpop.f32.mrb[0].mxu0
    %v137 = vadd.f32 %v60, %v136
    %v138 = vpop.f32.mrb[0].mxu0
    %139 = vdwg.mxu0
    %v140 = vmax.f32 %v137, 0.0
    %v141 = vld [vmem:[%s4] sm:$0xff]
    %v142 = vld [vmem:[%s4 + $0x8] sm:$0xff]
    %v143 = vld [vmem:[%s4 + $0x10] sm:$0xff]
    %v144 = vld [vmem:[%s4 + $0x18] sm:$0xff]
    %v145 = vld [vmem:[%s5] sm:$0x1]
    %v147 = vlaneseq
    %v148 = vshrl.u32 %v147, 7
    %v149 = vsub.s32 0, %v148
    %v150 = vrot.slane %v145, %v149
    %vm152 = vcmask 261120
    %v154 = vsel %vm152, %v140, 0
    %156 = vmatprep.subr.mxu0 0.0
    %157 = vmatpush1.msra.mxu0 %v141
    %158 = vmatprep.subr.mxu0 0.0
    %159 = vmatpush1.msra.mxu0 %v142
    %160 = vmatprep.subr.mxu0 0.0
    %161 = vmatpush1.msra.mxu0 %v143
    %162 = vmatprep.subr.mxu0 0.0
    %163 = vmatpush1.msra.mxu0 %v144
    %164 = vmatprep.subr.mxu0 0.0
    %165 = vmatpush1.msra.mxu0 0.0
    %166 = vmatprep.subr.mxu0 0.0
    %167 = vmatpush1.msra.mxu0 0.0
    %168 = vmatprep.subr.mxu0 0.0
    %169 = vmatpush1.msra.mxu0 0.0
    %170 = vmatprep.subr.mxu0 0.0
    %171 = vmatpush1.msra.mxu0 0.0
    %172 = vmatprep.subr.mxu0 0.0
    %173 = vmatpush1.msra.mxu0 0.0
    %174 = vmatprep.subr.mxu0 0.0
    %175 = vmatpush1.msra.mxu0 0.0
    %176 = vmatprep.subr.mxu0 0.0
    %177 = vmatpush1.msra.mxu0 0.0
    %178 = vmatprep.subr.mxu0 0.0
    %179 = vmatpush1.msra.mxu0 0.0
    %180 = vmatprep.subr.mxu0 0.0
    %181 = vmatpush1.msra.mxu0 0.0
    %182 = vmatprep.subr.mxu0 0.0
    %183 = vmatpush1.msra.mxu0 0.0
    %184 = vmatprep.subr.mxu0 0.0
    %185 = vmatpush1.msra.mxu0 0.0
    %186 = vmatprep.subr.mxu0 0.0
    %187 = vmatpush1.msra.mxu0 0.0
    %188 = vmatprep.subr.mxu0 0.0
    %189 = vmatpush1.msra.mxu0 0.0
    %190 = vmatprep.subr.mxu0 0.0
    %191 = vmatpush1.msra.mxu0 0.0
    %192 = vmatprep.subr.mxu0 0.0
    %193 = vmatpush1.msra.mxu0 0.0
    %194 = vmatprep.subr.mxu0 0.0
    %195 = vmatpush1.msra.mxu0 0.0
    %196 = vmatprep.subr.mxu0 0.0
    %197 = vmatpush1.msra.mxu0 0.0
    %198 = vmatprep.subr.mxu0 0.0
    %199 = vmatpush1.msra.mxu0 0.0
    %200 = vmatprep.subr.mxu0 0.0
    %201 = vmatpush1.msra.mxu0 0.0
    %202 = vmatprep.subr.mxu0 0.0
    %203 = vmatpush1.msra.mxu0 0.0
    %204 = vmatprep.subr.mxu0 0.0
    %205 = vmatpush1.msra.mxu0 0.0
    %206 = vmatprep.subr.mxu0 0.0
    %207 = vmatpush1.msra.mxu0 0.0
    %208 = vmatprep.subr.mxu0 0.0
    %209 = vmatpush1.msra.mxu0 0.0
    %210 = vmatprep.subr.mxu0 0.0
    %211 = vmatpush1.msra.mxu0 0.0
    %212 = vmatprep.subr.mxu0 0.0
    %213 = vmatpush1.msra.mxu0 0.0
    %214 = vmatprep.subr.mxu0 0.0
    %215 = vmatpush1.msra.mxu0 0.0
    %216 = vmatprep.subr.mxu0 0.0
    %217 = vmatpush1.msra.mxu0 0.0
    %218 = vmatprep.subr.mxu0 0.0
    %219 = vmatpush1.msra.mxu0 0.0
    %220 = vmatprep.mubr.f32.mxu0 0.0
    %221 = vmatmul.mubr.f32.gmra.mrb[0].mxu0 %v154
    %v222 = vpop.f32.mrb[0].mxu0
    %v223 = vadd.f32 %v150, %v222
    %v224 = vpop.f32.mrb[0].mxu0
    %225 = vdwg.mxu0
    %v226 = vmax.f32 %v223, 0.0
    %v227 = vld [vmem:[%s6] sm:$0xff]
    %v228 = vld [vmem:[%s6 + $0x8] sm:$0xff]
    %v229 = vld [vmem:[%s6 + $0x10] sm:$0xff]
    %v230 = vld [vmem:[%s6 + $0x18] sm:$0xff]
    %v231 = vld [vmem:[%s7] sm:$0x1]
    %v233 = vlaneseq
    %v234 = vshrl.u32 %v233, 7
    %v235 = vsub.s32 0, %v234
    %v236 = vrot.slane %v231, %v235
    %v239 = vsel %vm152, %v226, 0
    %241 = vmatprep.subr.mxu0 0.0
    %242 = vmatpush1.msra.mxu0 %v227
    %243 = vmatprep.subr.mxu0 0.0
    %244 = vmatpush1.msra.mxu0 %v228
    %245 = vmatprep.subr.mxu0 0.0
    %246 = vmatpush1.msra.mxu0 %v229
    %247 = vmatprep.subr.mxu0 0.0
    %248 = vmatpush1.msra.mxu0 %v230
    %249 = vmatprep.subr.mxu0 0.0
    %250 = vmatpush1.msra.mxu0 0.0
    %251 = vmatprep.subr.mxu0 0.0
    %252 = vmatpush1.msra.mxu0 0.0
    %253 = vmatprep.subr.mxu0 0.0
    %254 = vmatpush1.msra.mxu0 0.0
    %255 = vmatprep.subr.mxu0 0.0
    %256 = vmatpush1.msra.mxu0 0.0
    %257 = vmatprep.subr.mxu0 0.0
    %258 = vmatpush1.msra.mxu0 0.0
    %259 = vmatprep.subr.mxu0 0.0
    %260 = vmatpush1.msra.mxu0 0.0
    %261 = vmatprep.subr.mxu0 0.0
    %262 = vmatpush1.msra.mxu0 0.0
    %263 = vmatprep.subr.mxu0 0.0
    %264 = vmatpush1.msra.mxu0 0.0
    %265 = vmatprep.subr.mxu0 0.0
    %266 = vmatpush1.msra.mxu0 0.0
    %267 = vmatprep.subr.mxu0 0.0
    %268 = vmatpush1.msra.mxu0 0.0
    %269 = vmatprep.subr.mxu0 0.0
    %270 = vmatpush1.msra.mxu0 0.0
    %271 = vmatprep.subr.mxu0 0.0
    %272 = vmatpush1.msra.mxu0 0.0
    %273 = vmatprep.subr.mxu0 0.0
    %274 = vmatpush1.msra.mxu0 0.0
    %275 = vmatprep.subr.mxu0 0.0
    %276 = vmatpush1.msra.mxu0 0.0
    %277 = vmatprep.subr.mxu0 0.0
    %278 = vmatpush1.msra.mxu0 0.0
    %279 = vmatprep.subr.mxu0 0.0
    %280 = vmatpush1.msra.mxu0 0.0
    %281 = vmatprep.subr.mxu0 0.0
    %282 = vmatpush1.msra.mxu0 0.0
    %283 = vmatprep.subr.mxu0 0.0
    %284 = vmatpush1.msra.mxu0 0.0
    %285 = vmatprep.subr.mxu0 0.0
    %286 = vmatpush1.msra.mxu0 0.0
    %287 = vmatprep.subr.mxu0 0.0
    %288 = vmatpush1.msra.mxu0 0.0
    %289 = vmatprep.subr.mxu0 0.0
    %290 = vmatpush1.msra.mxu0 0.0
    %291 = vmatprep.subr.mxu0 0.0
    %292 = vmatpush1.msra.mxu0 0.0
    %293 = vmatprep.subr.mxu0 0.0
    %294 = vmatpush1.msra.mxu0 0.0
    %295 = vmatprep.subr.mxu0 0.0
    %296 = vmatpush1.msra.mxu0 0.0
    %297 = vmatprep.subr.mxu0 0.0
    %298 = vmatpush1.msra.mxu0 0.0
    %299 = vmatprep.subr.mxu0 0.0
    %300 = vmatpush1.msra.mxu0 0.0
    %301 = vmatprep.subr.mxu0 0.0
    %302 = vmatpush1.msra.mxu0 0.0
    %303 = vmatprep.subr.mxu0 0.0
    %304 = vmatpush1.msra.mxu0 0.0
    %305 = vmatprep.mubr.f32.mxu0 0.0
    %306 = vmatmul.mubr.f32.gmra.mrb[0].mxu0 %v239
    %v307 = vpop.f32.mrb[0].mxu0
    %v308 = vadd.f32 %v236, %v307
    %v309 = vpop.f32.mrb[0].mxu0
    %310 = vdwg.mxu0
    %vm311 = vcmask 31744
    %312 = vst.msk [vmem:[%s8] sm:$0xff] %vm311, %v308
    // Predicated region
    $region38: #{tpu_custom_call.1} parent=1 // pred_check
      _
    $region39: #{tpu_custom_call.1} parent=1 // pred_check_branch
      %314 = sbr.rel (0) target = $region41
    $region40: #{tpu_custom_call.1} parent=1 // pred_region
      _
    $region41: #{tpu_custom_call.1} parent=1 // pred_fallthru
      _
    // Predicated region
    $region42: #{tpu_custom_call.1} parent=1 // pred_check
      _
    $region43: #{tpu_custom_call.1} parent=1 // pred_check_branch
      %316 = sbr.rel (0) target = $region45
    $region44: #{tpu_custom_call.1} parent=1 // pred_region
      _
    $region45: #{tpu_custom_call.1} parent=1 // pred_fallthru
      _
    %317 = vsyncpa [#allocation4], 1

</llo_original>
